<compile_context>
chip_gen: v7x
topology: tpu7x:2x2x1
jax: 0.10.0
libtpu: 0.0.40
codegen_flags: <defaults>
</compile_context>

<pallas_src>
import functools
import math

import jax
import jax.numpy as jnp
from jax.experimental import pallas as pl
from jax.experimental.pallas import tpu as pltpu


def _round_up(x, m):
    return ((x + m - 1) // m) * m


def _cdiv(a, b):
    return -(-a // b)


def _vmem_cap_bytes():
    """Physical per-core VMEM (128 MiB on v5e/v6e, 64 MiB on v7x)."""
    try:
        cap = int(pltpu.get_tpu_info().vmem_capacity_bytes)
        return cap if cap > 0 else (64 << 20)
    except Exception:
        return 64 << 20  # conservative fallback (v7x per-TC)


_SMALL_N = 128          # below this, a single-block latency path is used
_TK_SINGLE_MAX = 2048   # largest contraction handled in one k step


def _pick_tm(n):
    """Adjacency row tile (multiple of 8).

    Prefers large tiles (DMA efficiency) but keeps >= 2 row tiles, with a mild
    preference for an even tile count so the "parallel" row axis splits evenly
    across the 2 TensorCores on v7x-class parts.  Padding waste is penalised
    more heavily than an odd split since it costs HBM traffic on every chip.
    """
    if n <= 1024:
        return max(8, _round_up(_cdiv(n, 2), 8))      # exactly two row tiles
    best_tm, best_score = 256, None
    for c in (512, 448, 384, 320, 256):
        nt = _cdiv(n, c)
        score = nt * c * (1.15 if nt % 2 else 1.0)
        if best_score is None or score < best_score:
            best_tm, best_score = c, score
    return best_tm


def _pick_tk(n):
    """Contraction (adjacency column) tile, always a multiple of 128."""
    n128 = _round_up(n, 128)
    if n128 <= _TK_SINGLE_MAX:
        return n128                                   # single reduction step
    best_tk, best_pad = 256, None
    for c in (2048, 1024, 512, 256):
        pad = _round_up(n, c) - n
        if best_pad is None or pad < best_pad or (pad == best_pad and c > best_tk):
            best_tk, best_pad = c, pad
    return best_tk


# ---------------------------------------------------------------------------
# Kernels
# ---------------------------------------------------------------------------
def _gcn_small_kernel(x_ref, adj_ref, w_ref, b_ref, out_ref):
    """Tiny graphs: everything resident, single block, all math in f32."""
    support = jnp.dot(x_ref[...], w_ref[...], preferred_element_type=jnp.float32)
    out = jnp.dot(adj_ref[...].astype(jnp.float32), support,
                  preferred_element_type=jnp.float32)
    out_ref[...] = (out + b_ref[...]).astype(out_ref.dtype)


def _support_kernel(x_ref, w_ref, s_ref):
    """support = X @ W for one row tile; cast once to the streaming dtype."""
    s_ref[...] = jnp.dot(x_ref[...], w_ref[...],
                         preferred_element_type=jnp.float32).astype(s_ref.dtype)


def _gcn_matmul_kernel(adj_ref, s_ref, b_ref, out_ref, *scratch, tk, resident):
    """One (row-tile i, contraction-tile k) step of  out = adj @ support + bias.

    The f32 accumulator is the output block itself when the output dtype is
    f32 (it stays VMEM-resident across k because its block index ignores k);
    otherwise a f32 VMEM scratch is used and cast on the last k step.
    """
    acc_ref = scratch[0] if scratch else out_ref
    k = pl.program_id(1)

    @pl.when(k == 0)
    def _init():
        # Initialise with the (f32) bias so no separate epilogue add is needed.
        acc_ref[...] = jnp.broadcast_to(b_ref[...], acc_ref.shape)

    if resident:
        # Whole support matrix is VMEM-resident; take the k-th (tk, F) slab.
        off = pl.multiple_of(k * tk, tk)
        s_blk = s_ref[pl.ds(off, tk), :]
    else:
        s_blk = s_ref[...]

    acc_ref[...] += jnp.dot(adj_ref[...], s_blk,
                            preferred_element_type=jnp.float32)

    if scratch:
        @pl.when(k == pl.num_programs(1) - 1)
        def _store():
            out_ref[...] = acc_ref[...].astype(out_ref.dtype)


# ---------------------------------------------------------------------------
# Wrapper
# ---------------------------------------------------------------------------
@functools.partial(jax.jit, static_argnames=("use_bf16",))
def graph_convolution(x, adj, weight, bias=None, *, use_bf16=True):
    """Pallas GCN layer forward: adj @ (x @ weight) [+ bias].

    use_bf16 (default True): the N x N adjacency (and the small support
    matrix) are streamed as bf16 -- the kernel is HBM-bound on the adjacency
    on every TPU generation, so halving its bytes is the dominant lever.
    Accumulation is always f32.
    """
    n, f_in = x.shape
    f_out = weight.shape[1]
    out_dtype = x.dtype
    f32 = jnp.float32

    bias_vec = bias if bias is not None else jnp.zeros((f_out,), f32)

    # ------------------------- tiny-graph fast path -------------------------
    if n <= _SMALL_N and (n * n + n * f_in + f_in * f_out) * 4 <= (2 << 20):
        vmem = functools.partial(pl.BlockSpec, memory_space=pltpu.VMEM)
        return pl.pallas_call(
            _gcn_small_kernel,
            out_shape=jax.ShapeDtypeStruct((n, f_out), out_dtype),
            in_specs=[vmem(), vmem(), vmem(), vmem()],
            out_specs=vmem(),
        )(x, adj, weight, bias_vec.astype(f32).reshape(1, f_out))

    # ------------------------------ tiled path ------------------------------
    stream_dtype = jnp.bfloat16 if use_bf16 else adj.dtype
    s_bytes = jnp.dtype(stream_dtype).itemsize
    o_bytes = jnp.dtype(out_dtype).itemsize

    tm = _pick_tm(n)
    tk = _pick_tk(n)
    f_out_p = _round_up(f_out, 128)      # lane-dense weight cols / output
    n_pm = _round_up(n, tm)              # adjacency row padding (often 0)
    n_pk = _round_up(n, tk)              # contraction padding (often 0)
    nkt = n_pk // tk

    # Keep the (small) support matrix fully VMEM-resident across the k sweep
    # when there is more than one k step and it fits comfortably; otherwise
    # it is streamed as (tk, f_out_p) blocks.
    resident = nkt > 1 and n_pk * f_out_p * s_bytes <= (4 << 20)

    # --- support = X @ W, computed once.  Padded rows (n..n_pk) and padded
    # columns (f_out..f_out_p) are exactly zero, so padded adjacency columns
    # contribute nothing to the reduction. ---
    x_p = x if n_pk == n else jnp.pad(x, ((0, n_pk - n), (0, 0)))
    w_p = weight if f_out_p == f_out else jnp.pad(weight, ((0, 0), (0, f_out_p - f_out)))
    ts = max(c for c in (512, 256, 128) if n_pk % c == 0)
    support = pl.pallas_call(
        _support_kernel,
        out_shape=jax.ShapeDtypeStruct((n_pk, f_out_p), stream_dtype),
        grid_spec=pltpu.PrefetchScalarGridSpec(
            num_scalar_prefetch=0,
            grid=(n_pk // ts,),
            in_specs=[pl.BlockSpec((ts, f_in), lambda i: (i, 0)),
                      pl.BlockSpec((f_in, f_out_p), lambda i: (0, 0))],
            out_specs=pl.BlockSpec((ts, f_out_p), lambda i: (i, 0)),
        ),
        compiler_params=pltpu.CompilerParams(
            dimension_semantics=("parallel",)),
    )(x_p, w_p)

    # --- adjacency: cast (bf16 streaming) and pad only when needed.  XLA
    # fuses the convert into the pad, so there is at most one extra N^2
    # materialisation (zero when adj is already in the streaming dtype and the
    # tiles divide N). ---
    adj_s = adj if adj.dtype == stream_dtype else adj.astype(stream_dtype)
    if n_pm != n or n_pk != n:
        adj_s = jnp.pad(adj_s, ((0, n_pm - n), (0, n_pk - n)))

    bias_row = bias_vec.astype(f32)
    if f_out_p != f_out:
        bias_row = jnp.pad(bias_row, (0, f_out_p - f_out))
    bias_row = bias_row.reshape(1, f_out_p)

    grid = (n_pm // tm, nkt)
    use_scratch = out_dtype != jnp.float32

    sup_spec = (pl.BlockSpec((n_pk, f_out_p), lambda i, k: (0, 0)) if resident
                else pl.BlockSpec((tk, f_out_p), lambda i, k: (k, 0)))
    in_specs = [
        pl.BlockSpec((tm, tk), lambda i, k: (i, k)),       # adjacency (streamed)
        sup_spec,                                          # support
        pl.BlockSpec((1, f_out_p), lambda i, k: (0, 0)),   # bias (resident)
    ]
    scratch_shapes = [pltpu.VMEM((tm, f_out_p), jnp.float32)] if use_scratch else []

    # VMEM budget (double-buffered blocks), scoped limit clamped to physical
    # VMEM (64 MiB on v7x) with a hard 56 MiB cap.
    sup_blk = n_pk * f_out_p * s_bytes if resident else tk * f_out_p * s_bytes
    vmem_need = (2 * tm * tk * s_bytes + 2 * sup_blk + 2 * f_out_p * 4
                 + 2 * tm * f_out_p * o_bytes
                 + (tm * f_out_p * 4 if use_scratch else 0))
    cap = _vmem_cap_bytes()
    vmem_limit = int(min(max(8 << 20, 2 * vmem_need, vmem_need + (2 << 20)),
                         (cap * 3) // 4, 56 << 20))

    sup_reads = (1 if (resident or nkt == 1) else grid[0]) * n_pk * f_out_p * s_bytes
    cost = pl.CostEstimate(
        flops=2 * n_pm * n_pk * f_out_p,
        transcendentals=0,
        bytes_accessed=int(n_pm * n_pk * s_bytes + sup_reads
                           + n_pm * f_out_p * o_bytes + f_out_p * 4),
    )

    kernel = functools.partial(_gcn_matmul_kernel, tk=tk, resident=resident)
    out_p = pl.pallas_call(
        kernel,
        out_shape=jax.ShapeDtypeStruct((n_pm, f_out_p), out_dtype),
        grid_spec=pltpu.PrefetchScalarGridSpec(
            num_scalar_prefetch=0,
            grid=grid,
            in_specs=in_specs,
            out_specs=pl.BlockSpec((tm, f_out_p), lambda i, k: (i, 0)),
            scratch_shapes=scratch_shapes,
        ),
        compiler_params=pltpu.CompilerParams(
            dimension_semantics=("parallel", "arbitrary"),
            vmem_limit_bytes=vmem_limit,
        ),
        cost_estimate=cost,
    )(adj_s, support, bias_row)

    return out_p[:n, :f_out]


# ---------------------------------------------------------------------------
# Parameter init (matches GraphConvolution.reset_parameters) + test harness
# ---------------------------------------------------------------------------
def init_gcn_params(key, in_features, out_features, bias=True):
    """uniform(-stdv, stdv) with stdv = 1/sqrt(out_features)."""
    stdv = 1.0 / math.sqrt(out_features)
    kw, kb = jax.random.split(key)
    weight = jax.random.uniform(
        kw, (in_features, out_features), jnp.float32, minval=-stdv, maxval=stdv)
    b = None
    if bias:
        b = jax.random.uniform(
            kb, (out_features,), jnp.float32, minval=-stdv, maxval=stdv)
    return weight, b


def _make_inputs(key, n, f_in):
    k_x, k_adj = jax.random.split(key)
    x = jax.random.normal(k_x, (n, f_in), dtype=jnp.float32)
    a = jax.random.uniform(k_adj, (n, n), dtype=jnp.float32)
    adj = (a + a.T) * 0.5
    adj = adj / jnp.sum(adj, axis=1, keepdims=True)
    return x, adj


if __name__ == "__main__":
    key = jax.random.PRNGKey(0)
    k1, k2, k3, k4, k5, k6 = jax.random.split(key, 6)

    # ---- Test 1: tiny-graph single-block path (64 nodes, 32 -> 16, bias) ----
    N1, FI1, FO1 = 64, 32, 16
    x1, adj1 = _make_inputs(k1, N1, FI1)
    w1, b1 = init_gcn_params(k2, FI1, FO1, bias=True)
    out1 = jax.block_until_ready(graph_convolution(x1, adj1, w1, b1))
    ref1 = adj1 @ (x1 @ w1) + b1
    assert out1.shape == (N1, FO1)
    assert jnp.allclose(out1, ref1, atol=1e-4, rtol=1e-4), "small-path mismatch"

    # ---- Test 2: tiled path, f32 streaming (640 nodes, 48 -> 24, bias) ----
    N2, FI2, FO2 = 640, 48, 24
    x2, adj2 = _make_inputs(k3, N2, FI2)
    w2, b2 = init_gcn_params(k4, FI2, FO2, bias=True)
    out2 = jax.block_until_ready(
        graph_convolution(x2, adj2, w2, b2, use_bf16=False))
    ref2 = adj2 @ (x2 @ w2) + b2
    assert out2.shape == (N2, FO2)
    assert jnp.allclose(out2, ref2, atol=1e-3, rtol=1e-3), "tiled f32 mismatch"

    # ---- Test 3: tiled path, default bf16 adjacency streaming, no bias ----
    out3 = jax.block_until_ready(graph_convolution(x2, adj2, w2, None))
    ref3 = adj2 @ (x2 @ w2)
    assert out3.shape == (N2, FO2)
    assert jnp.allclose(out3, ref3, atol=5e-2, rtol=5e-2), "bf16-path mismatch"

    # ---- Test 4: multi-k-step path with VMEM-resident support (2304 nodes) --
    N4, FI4, FO4 = 2304, 40, 20
    x4, adj4 = _make_inputs(k5, N4, FI4)
    w4, b4 = init_gcn_params(k6, FI4, FO4, bias=True)
    out4 = jax.block_until_ready(graph_convolution(x4, adj4, w4, b4))
    ref4 = adj4 @ (x4 @ w4) + b4
    assert out4.shape == (N4, FO4)
    assert jnp.allclose(out4, ref4, atol=5e-2, rtol=5e-2), "resident-support mismatch"

    print("KERNEL_OK")
</pallas_src>

<mosaic_0001>
module attributes {stable_mosaic.version = 11 : i64} {
  func.func @_gcn_small_kernel(%arg0: memref<64x32xf32, #tpu.memory_space<vmem>>, %arg1: memref<64x64xf32, #tpu.memory_space<vmem>>, %arg2: memref<32x16xf32, #tpu.memory_space<vmem>>, %arg3: memref<1x16xf32, #tpu.memory_space<vmem>>, %arg4: memref<64x16xf32, #tpu.memory_space<vmem>>) attributes {dimension_semantics = [], scalar_prefetch = 0 : i64, scratch_operands = 0 : i64, tpu.core_type = #tpu.core_type<tc>} {
    %c0 = arith.constant 0 : index
    %c0_0 = arith.constant 0 : index
    %0 = vector.load %arg0[%c0, %c0_0] : memref<64x32xf32, #tpu.memory_space<vmem>>, vector<64x32xf32>
    %c0_1 = arith.constant 0 : index
    %c0_2 = arith.constant 0 : index
    %1 = vector.load %arg2[%c0_1, %c0_2] : memref<32x16xf32, #tpu.memory_space<vmem>>, vector<32x16xf32>
    %cst = arith.constant dense<0.000000e+00> : vector<64x16xf32>
    %2 = tpu.matmul %0, %1, %cst {dimension_numbers = #tpu.dot_dimension_numbers<[1], [0], [0], [1], [0, 0, 1, 1], [], []>} : vector<64x32xf32>, vector<32x16xf32>, vector<64x16xf32> -> vector<64x16xf32>
    %c0_3 = arith.constant 0 : index
    %c0_4 = arith.constant 0 : index
    %3 = vector.load %arg1[%c0_3, %c0_4] : memref<64x64xf32, #tpu.memory_space<vmem>>, vector<64x64xf32>
    %cst_5 = arith.constant dense<0.000000e+00> : vector<64x16xf32>
    %4 = tpu.matmul %3, %2, %cst_5 {dimension_numbers = #tpu.dot_dimension_numbers<[1], [0], [0], [1], [0, 0, 1, 1], [], []>} : vector<64x64xf32>, vector<64x16xf32>, vector<64x16xf32> -> vector<64x16xf32>
    %c0_6 = arith.constant 0 : index
    %c0_7 = arith.constant 0 : index
    %5 = vector.load %arg3[%c0_6, %c0_7] : memref<1x16xf32, #tpu.memory_space<vmem>>, vector<1x16xf32>
    %6 = vector.broadcast %5 : vector<1x16xf32> to vector<64x16xf32>
    %7 = arith.addf %4, %6 : vector<64x16xf32>
    %c0_8 = arith.constant 0 : index
    %c0_9 = arith.constant 0 : index
    %8 = vector.load %arg4[%c0_8, %c0_9] : memref<64x16xf32, #tpu.memory_space<vmem>>, vector<64x16xf32>
    tpu.vector_store %arg4[%c0_8, %c0_9], %7 {strides = array<i32>} : memref<64x16xf32, #tpu.memory_space<vmem>>, vector<64x16xf32>,
    return
  }
}

</mosaic_0001>

<llo_original>
// kernel: graph_convolution.1
$region0: #{graph_convolution.1}
  #allocation0 [shape = 'u32[]', space=smem, size = 0x4, offset = 0x4, fixed_abs, tag = 'smem constant byte address 0x4 - core index']
  #allocation1 [shape = 'u32[144,128]{1,0:T(1,128)}', space=vmem, size = 0x12000, scoped, tag = 'internal scratch']
  %s0 = inlined_call_operand.vmem [shape: f32[64,32], index: 0, kind: input, shape index: {}]
  %s1 = inlined_call_operand.vmem [shape: f32[64,64], index: 1, kind: input, shape index: {}]
  %s2 = inlined_call_operand.vmem [shape: f32[32,16], index: 2, kind: input, shape index: {}]
  %s3 = inlined_call_operand.vmem [shape: f32[1,16], index: 3, kind: input, shape index: {}]
  %s4 = inlined_call_operand.vmem [shape: f32[64,16], index: 4, kind: output, shape index: {}]
  %s5 = sld [smem:[#allocation0]]
  $region26: #{graph_convolution.1} parent=0
    _
  %s7 = ssub.s32 1, %s5
  %s8 = scalar_select 0, %s7, %s5
  // Predicated region
  $region2: #{graph_convolution.1} parent=0 // pred_check
    _
  $region3: #{graph_convolution.1} parent=0 // pred_check_branch
    %10 = sbr.rel (0) target = $region5
  $region4: #{graph_convolution.1} parent=0 // pred_region
    _
  $region5: #{graph_convolution.1} parent=0 // pred_fallthru
    _
  // Predicated region
  $region6: #{graph_convolution.1} parent=0 // pred_check
    _
  $region7: #{graph_convolution.1} parent=0 // pred_check_branch
    %12 = sbr.rel (0) target = $region9
  $region8: #{graph_convolution.1} parent=0 // pred_region
    _
  $region9: #{graph_convolution.1} parent=0 // pred_fallthru
    _
  // Predicated region
  $region10: #{graph_convolution.1} parent=0 // pred_check
    _
  $region11: #{graph_convolution.1} parent=0 // pred_check_branch
    %14 = sbr.rel (0) target = $region13
  $region12: #{graph_convolution.1} parent=0 // pred_region
    _
  $region13: #{graph_convolution.1} parent=0 // pred_fallthru
    _
  // Predicated region
  $region14: #{graph_convolution.1} parent=0 // pred_check
    _
  $region15: #{graph_convolution.1} parent=0 // pred_check_branch
    %16 = sbr.rel (0) target = $region17
  $region16: #{graph_convolution.1} parent=0 // pred_region
    _
  $region17: #{graph_convolution.1} parent=0 // pred_fallthru
    _
  %v17 = vld [vmem:[%s0] sm:$0xff]
  %v18 = vld [vmem:[%s0 + $0x8] sm:$0xff]
  %v19 = vld [vmem:[%s0 + $0x10] sm:$0xff]
  %v20 = vld [vmem:[%s0 + $0x18] sm:$0xff]
  %v21 = vld [vmem:[%s0 + $0x20] sm:$0xff]
  %v22 = vld [vmem:[%s0 + $0x28] sm:$0xff]
  %v23 = vld [vmem:[%s0 + $0x30] sm:$0xff]
  %v24 = vld [vmem:[%s0 + $0x38] sm:$0xff]
  %v25 = vld [vmem:[%s2] sm:$0xff]
  %v26 = vld [vmem:[%s2 + $0x8] sm:$0xff]
  %v27 = vld [vmem:[%s2 + $0x10] sm:$0xff]
  %v28 = vld [vmem:[%s2 + $0x18] sm:$0xff]
  %vm29 = vcmask 261120
  %v31 = vsel %vm29, %v17, 0
  %v34 = vsel %vm29, %v18, 0
  %v37 = vsel %vm29, %v19, 0
  %v40 = vsel %vm29, %v20, 0
  %v43 = vsel %vm29, %v21, 0
  %v46 = vsel %vm29, %v22, 0
  %v49 = vsel %vm29, %v23, 0
  %v52 = vsel %vm29, %v24, 0
  %54 = vmatprep.subr.mxu0 0.0
  %55 = vmatpush1.msra.mxu0 %v25
  %56 = vmatprep.subr.mxu0 0.0
  %57 = vmatpush1.msra.mxu0 %v26
  %58 = vmatprep.subr.mxu0 0.0
  %59 = vmatpush1.msra.mxu0 %v27
  %60 = vmatprep.subr.mxu0 0.0
  %61 = vmatpush1.msra.mxu0 %v28
  %62 = vmatprep.subr.mxu0 0.0
  %63 = vmatpush1.msra.mxu0 0.0
  %64 = vmatprep.subr.mxu0 0.0
  %65 = vmatpush1.msra.mxu0 0.0
  %66 = vmatprep.subr.mxu0 0.0
  %67 = vmatpush1.msra.mxu0 0.0
  %68 = vmatprep.subr.mxu0 0.0
  %69 = vmatpush1.msra.mxu0 0.0
  %70 = vmatprep.subr.mxu0 0.0
  %71 = vmatpush1.msra.mxu0 0.0
  %72 = vmatprep.subr.mxu0 0.0
  %73 = vmatpush1.msra.mxu0 0.0
  %74 = vmatprep.subr.mxu0 0.0
  %75 = vmatpush1.msra.mxu0 0.0
  %76 = vmatprep.subr.mxu0 0.0
  %77 = vmatpush1.msra.mxu0 0.0
  %78 = vmatprep.subr.mxu0 0.0
  %79 = vmatpush1.msra.mxu0 0.0
  %80 = vmatprep.subr.mxu0 0.0
  %81 = vmatpush1.msra.mxu0 0.0
  %82 = vmatprep.subr.mxu0 0.0
  %83 = vmatpush1.msra.mxu0 0.0
  %84 = vmatprep.subr.mxu0 0.0
  %85 = vmatpush1.msra.mxu0 0.0
  %86 = vmatprep.subr.mxu0 0.0
  %87 = vmatpush1.msra.mxu0 0.0
  %88 = vmatprep.subr.mxu0 0.0
  %89 = vmatpush1.msra.mxu0 0.0
  %90 = vmatprep.subr.mxu0 0.0
  %91 = vmatpush1.msra.mxu0 0.0
  %92 = vmatprep.subr.mxu0 0.0
  %93 = vmatpush1.msra.mxu0 0.0
  %94 = vmatprep.subr.mxu0 0.0
  %95 = vmatpush1.msra.mxu0 0.0
  %96 = vmatprep.subr.mxu0 0.0
  %97 = vmatpush1.msra.mxu0 0.0
  %98 = vmatprep.subr.mxu0 0.0
  %99 = vmatpush1.msra.mxu0 0.0
  %100 = vmatprep.subr.mxu0 0.0
  %101 = vmatpush1.msra.mxu0 0.0
  %102 = vmatprep.subr.mxu0 0.0
  %103 = vmatpush1.msra.mxu0 0.0
  %104 = vmatprep.subr.mxu0 0.0
  %105 = vmatpush1.msra.mxu0 0.0
  %106 = vmatprep.subr.mxu0 0.0
  %107 = vmatpush1.msra.mxu0 0.0
  %108 = vmatprep.subr.mxu0 0.0
  %109 = vmatpush1.msra.mxu0 0.0
  %110 = vmatprep.subr.mxu0 0.0
  %111 = vmatpush1.msra.mxu0 0.0
  %112 = vmatprep.subr.mxu0 0.0
  %113 = vmatpush1.msra.mxu0 0.0
  %114 = vmatprep.subr.mxu0 0.0
  %115 = vmatpush1.msra.mxu0 0.0
  %116 = vmatprep.subr.mxu0 0.0
  %117 = vmatpush1.msra.mxu0 0.0
  %118 = vmatprep.mubr.f32.mxu0 0.0
  %119 = vmatmul.mubr.f32.gmra.mrb[0].mxu0 %v31
  %v120 = vpop.f32.mrb[0].mxu0
  %v121 = vadd.f32 0.0, %v120
  %v122 = vpop.f32.mrb[0].mxu0
  %123 = vmatprep.mubr.f32.mxu0 0.0
  %124 = vmatmul.mubr.f32.gmra.mrb[0].mxu0 %v34
  %v125 = vpop.f32.mrb[0].mxu0
  %v126 = vadd.f32 0.0, %v125
  %v127 = vpop.f32.mrb[0].mxu0
  %128 = vmatprep.mubr.f32.mxu0 0.0
  %129 = vmatmul.mubr.f32.gmra.mrb[0].mxu0 %v37
  %v130 = vpop.f32.mrb[0].mxu0
  %v131 = vadd.f32 0.0, %v130
  %v132 = vpop.f32.mrb[0].mxu0
  %133 = vmatprep.mubr.f32.mxu0 0.0
  %134 = vmatmul.mubr.f32.gmra.mrb[0].mxu0 %v40
  %v135 = vpop.f32.mrb[0].mxu0
  %v136 = vadd.f32 0.0, %v135
  %v137 = vpop.f32.mrb[0].mxu0
  %138 = vmatprep.mubr.f32.mxu0 0.0
  %139 = vmatmul.mubr.f32.gmra.mrb[0].mxu0 %v43
  %v140 = vpop.f32.mrb[0].mxu0
  %v141 = vadd.f32 0.0, %v140
  %v142 = vpop.f32.mrb[0].mxu0
  %143 = vmatprep.mubr.f32.mxu0 0.0
  %144 = vmatmul.mubr.f32.gmra.mrb[0].mxu0 %v46
  %v145 = vpop.f32.mrb[0].mxu0
  %v146 = vadd.f32 0.0, %v145
  %v147 = vpop.f32.mrb[0].mxu0
  %148 = vmatprep.mubr.f32.mxu0 0.0
  %149 = vmatmul.mubr.f32.gmra.mrb[0].mxu0 %v49
  %v150 = vpop.f32.mrb[0].mxu0
  %v151 = vadd.f32 0.0, %v150
  %v152 = vpop.f32.mrb[0].mxu0
  %153 = vmatprep.mubr.f32.mxu0 0.0
  %154 = vmatmul.mubr.f32.gmra.mrb[0].mxu0 %v52
  %v155 = vpop.f32.mrb[0].mxu0
  %v156 = vadd.f32 0.0, %v155
  %v157 = vpop.f32.mrb[0].mxu0
  %158 = vdwg.mxu0
  %v159 = vld [vmem:[%s1] sm:$0xff]
  %v160 = vld [vmem:[%s1 + $0x8] sm:$0xff]
  %v161 = vld [vmem:[%s1 + $0x10] sm:$0xff]
  %v162 = vld [vmem:[%s1 + $0x18] sm:$0xff]
  %v163 = vld [vmem:[%s1 + $0x20] sm:$0xff]
  %v164 = vld [vmem:[%s1 + $0x28] sm:$0xff]
  %v165 = vld [vmem:[%s1 + $0x30] sm:$0xff]
  %v166 = vld [vmem:[%s1 + $0x38] sm:$0xff]
  %v167 = vld [vmem:[%s3] sm:$0x1]
  %v169 = vlaneseq
  %v170 = vshrl.u32 %v169, 7
  %v171 = vsub.s32 0, %v170
  %v172 = vrot.slane %v167, %v171
  %vm174 = vcmask 523264
  %v176 = vsel %vm174, %v159, 0
  %v179 = vsel %vm174, %v160, 0
  %v182 = vsel %vm174, %v161, 0
  %v185 = vsel %vm174, %v162, 0
  %v188 = vsel %vm174, %v163, 0
  %v191 = vsel %vm174, %v164, 0
  %v194 = vsel %vm174, %v165, 0
  %v197 = vsel %vm174, %v166, 0
  %199 = vmatprep.subr.mxu0 0.0
  %200 = vmatpush1.msra.mxu0 %v121
  %201 = vmatprep.subr.mxu0 0.0
  %202 = vmatpush1.msra.mxu0 %v126
  %203 = vmatprep.subr.mxu0 0.0
  %204 = vmatpush1.msra.mxu0 %v131
  %205 = vmatprep.subr.mxu0 0.0
  %206 = vmatpush1.msra.mxu0 %v136
  %207 = vmatprep.subr.mxu0 0.0
  %208 = vmatpush1.msra.mxu0 %v141
  %209 = vmatprep.subr.mxu0 0.0
  %210 = vmatpush1.msra.mxu0 %v146
  %211 = vmatprep.subr.mxu0 0.0
  %212 = vmatpush1.msra.mxu0 %v151
  %213 = vmatprep.subr.mxu0 0.0
  %214 = vmatpush1.msra.mxu0 %v156
  %215 = vmatprep.subr.mxu0 0.0
  %216 = vmatpush1.msra.mxu0 0.0
  %217 = vmatprep.subr.mxu0 0.0
  %218 = vmatpush1.msra.mxu0 0.0
  %219 = vmatprep.subr.mxu0 0.0
  %220 = vmatpush1.msra.mxu0 0.0
  %221 = vmatprep.subr.mxu0 0.0
  %222 = vmatpush1.msra.mxu0 0.0
  %223 = vmatprep.subr.mxu0 0.0
  %224 = vmatpush1.msra.mxu0 0.0
  %225 = vmatprep.subr.mxu0 0.0
  %226 = vmatpush1.msra.mxu0 0.0
  %227 = vmatprep.subr.mxu0 0.0
  %228 = vmatpush1.msra.mxu0 0.0
  %229 = vmatprep.subr.mxu0 0.0
  %230 = vmatpush1.msra.mxu0 0.0
  %231 = vmatprep.subr.mxu0 0.0
  %232 = vmatpush1.msra.mxu0 0.0
  %233 = vmatprep.subr.mxu0 0.0
  %234 = vmatpush1.msra.mxu0 0.0
  %235 = vmatprep.subr.mxu0 0.0
  %236 = vmatpush1.msra.mxu0 0.0
  %237 = vmatprep.subr.mxu0 0.0
  %238 = vmatpush1.msra.mxu0 0.0
  %239 = vmatprep.subr.mxu0 0.0
  %240 = vmatpush1.msra.mxu0 0.0
  %241 = vmatprep.subr.mxu0 0.0
  %242 = vmatpush1.msra.mxu0 0.0
  %243 = vmatprep.subr.mxu0 0.0
  %244 = vmatpush1.msra.mxu0 0.0
  %245 = vmatprep.subr.mxu0 0.0
  %246 = vmatpush1.msra.mxu0 0.0
  %247 = vmatprep.subr.mxu0 0.0
  %248 = vmatpush1.msra.mxu0 0.0
  %249 = vmatprep.subr.mxu0 0.0
  %250 = vmatpush1.msra.mxu0 0.0
  %251 = vmatprep.subr.mxu0 0.0
  %252 = vmatpush1.msra.mxu0 0.0
  %253 = vmatprep.subr.mxu0 0.0
  %254 = vmatpush1.msra.mxu0 0.0
  %255 = vmatprep.subr.mxu0 0.0
  %256 = vmatpush1.msra.mxu0 0.0
  %257 = vmatprep.subr.mxu0 0.0
  %258 = vmatpush1.msra.mxu0 0.0
  %259 = vmatprep.subr.mxu0 0.0
  %260 = vmatpush1.msra.mxu0 0.0
  %261 = vmatprep.subr.mxu0 0.0
  %262 = vmatpush1.msra.mxu0 0.0
  %263 = vmatprep.mubr.f32.mxu0 0.0
  %264 = vmatmul.mubr.f32.gmra.mrb[0].mxu0 %v176
  %v265 = vpop.f32.mrb[0].mxu0
  %v266 = vadd.f32 %v172, %v265
  %v267 = vpop.f32.mrb[0].mxu0
  %268 = vmatprep.mubr.f32.mxu0 0.0
  %269 = vmatmul.mubr.f32.gmra.mrb[0].mxu0 %v179
  %v270 = vpop.f32.mrb[0].mxu0
  %v271 = vadd.f32 %v172, %v270
  %v272 = vpop.f32.mrb[0].mxu0
  %273 = vmatprep.mubr.f32.mxu0 0.0
  %274 = vmatmul.mubr.f32.gmra.mrb[0].mxu0 %v182
  %v275 = vpop.f32.mrb[0].mxu0
  %v276 = vadd.f32 %v172, %v275
  %v277 = vpop.f32.mrb[0].mxu0
  %278 = vmatprep.mubr.f32.mxu0 0.0
  %279 = vmatmul.mubr.f32.gmra.mrb[0].mxu0 %v185
  %v280 = vpop.f32.mrb[0].mxu0
  %v281 = vadd.f32 %v172, %v280
  %v282 = vpop.f32.mrb[0].mxu0
  %283 = vmatprep.mubr.f32.mxu0 0.0
  %284 = vmatmul.mubr.f32.gmra.mrb[0].mxu0 %v188
  %v285 = vpop.f32.mrb[0].mxu0
  %v286 = vadd.f32 %v172, %v285
  %v287 = vpop.f32.mrb[0].mxu0
  %288 = vmatprep.mubr.f32.mxu0 0.0
  %289 = vmatmul.mubr.f32.gmra.mrb[0].mxu0 %v191
  %v290 = vpop.f32.mrb[0].mxu0
  %v291 = vadd.f32 %v172, %v290
  %v292 = vpop.f32.mrb[0].mxu0
  %293 = vmatprep.mubr.f32.mxu0 0.0
  %294 = vmatmul.mubr.f32.gmra.mrb[0].mxu0 %v194
  %v295 = vpop.f32.mrb[0].mxu0
  %v296 = vadd.f32 %v172, %v295
  %v297 = vpop.f32.mrb[0].mxu0
  %298 = vmatprep.mubr.f32.mxu0 0.0
  %299 = vmatmul.mubr.f32.gmra.mrb[0].mxu0 %v197
  %v300 = vpop.f32.mrb[0].mxu0
  %v301 = vadd.f32 %v172, %v300
  %v302 = vpop.f32.mrb[0].mxu0
  %303 = vdwg.mxu0
  %vm304 = vcmask 130048
  %305 = vst.msk [vmem:[%s4] sm:$0xff] %vm304, %v266
  %306 = vst.msk [vmem:[%s4 + $0x8] sm:$0xff] %vm304, %v271
  %307 = vst.msk [vmem:[%s4 + $0x10] sm:$0xff] %vm304, %v276
  %308 = vst.msk [vmem:[%s4 + $0x18] sm:$0xff] %vm304, %v281
  %309 = vst.msk [vmem:[%s4 + $0x20] sm:$0xff] %vm304, %v286
  %310 = vst.msk [vmem:[%s4 + $0x28] sm:$0xff] %vm304, %v291
  %311 = vst.msk [vmem:[%s4 + $0x30] sm:$0xff] %vm304, %v296
  %312 = vst.msk [vmem:[%s4 + $0x38] sm:$0xff] %vm304, %v301
  // Predicated region
  $region18: #{graph_convolution.1} parent=0 // pred_check
    _
  $region19: #{graph_convolution.1} parent=0 // pred_check_branch
    %314 = sbr.rel (0) target = $region21
  $region20: #{graph_convolution.1} parent=0 // pred_region
    _
  $region21: #{graph_convolution.1} parent=0 // pred_fallthru
    _
  // Predicated region
  $region22: #{graph_convolution.1} parent=0 // pred_check
    _
  $region23: #{graph_convolution.1} parent=0 // pred_check_branch
    %316 = sbr.rel (0) target = $region25
  $region24: #{graph_convolution.1} parent=0 // pred_region
    _
  $region25: #{graph_convolution.1} parent=0 // pred_fallthru
    _

</llo_original>
